<compile_context>
chip_gen: v7x
topology: tpu7x:2x2x1
jax: 0.10.0
libtpu: 0.0.40
codegen_flags: <defaults>
</compile_context>

<pallas_src>
import jax
import jax.numpy as jnp
from jax.experimental import pallas as pl
from jax.experimental.pallas import tpu as pltpu


# ----------------------------------------------------------------------------
# Fused kernel: conv-as-im2col-matmul branch + linear branch, one invocation.
#   patches_ref : (B, 9*Cin, H*W)   im2col'd conv input   (K ordered as (kh, kw, cin))
#   wc_ref      : (Cout, 9*Cin)     flattened conv weight (same K order)
#   bc_ref      : (Cout, 1)         conv bias
#   xl_ref      : (B*S, D)          flattened crossattn tokens
#   wl_ref      : (D, Hd)           linear weight (already transposed to (in, out))
#   bl_ref      : (1, Hd)           linear bias
#   conv_out_ref: (B, Cout, H*W)    maps 1:1 onto NCHW after a contiguous reshape
#   lin_out_ref : (B*S, Hd)
# ----------------------------------------------------------------------------
def fused_hybrid_kernel(patches_ref, wc_ref, bc_ref, xl_ref, wl_ref, bl_ref,
                        conv_out_ref, lin_out_ref):
    B = patches_ref.shape[0]
    w_flat = wc_ref[...]                 # (Cout, 9*Cin)
    bias_c = bc_ref[...]                 # (Cout, 1) — broadcasts over the lane axis

    # Conv branch: one lane-dense MXU matmul per batch element (B is tiny, static unroll).
    for b in range(B):
        acc = jnp.dot(w_flat, patches_ref[b],
                      preferred_element_type=jnp.float32)      # (Cout, H*W)
        conv_out_ref[b] = (acc + bias_c).astype(conv_out_ref.dtype)

    # Linear branch.
    lin = jnp.dot(xl_ref[...], wl_ref[...],
                  preferred_element_type=jnp.float32)           # (B*S, Hd)
    lin_out_ref[...] = (lin + bl_ref[0, :]).astype(lin_out_ref.dtype)


# ----------------------------------------------------------------------------
# HybridConditioner forward (jit this so im2col fuses into one producer).
# params (PyTorch conventions):
#   conv_w : (Cout, Cin, 3, 3)  OIHW        conv_b : (Cout,)
#   lin_w  : (Hd, D)            (out, in)   lin_b  : (Hd,)
# ----------------------------------------------------------------------------
def hybrid_conditioner_forward(c_concat, c_crossattn, params):
    B, Cin, H, W = c_concat.shape
    Cout = params["conv_w"].shape[0]
    Bs, S, D = c_crossattn.shape
    Hd = params["lin_w"].shape[0]

    # --- im2col: single fused XLA producer -> (B, 9*Cin, H*W), K order (kh, kw, cin) ---
    x_pad = jnp.pad(c_concat, ((0, 0), (0, 0), (1, 1), (1, 1)))
    taps = [x_pad[:, :, kh:kh + H, kw:kw + W].reshape(B, Cin, H * W)
            for kh in range(3) for kw in range(3)]
    patches = jnp.concatenate(taps, axis=1)                       # (B, 9*Cin, H*W)

    # --- weight layout conversions from PyTorch conventions ---
    # OIHW -> (Cout, kH, kW, Cin) -> (Cout, 9*Cin), K order (kh, kw, cin) to match patches.
    w_conv_flat = jnp.transpose(params["conv_w"], (0, 2, 3, 1)).reshape(Cout, 9 * Cin)
    b_conv = params["conv_b"].reshape(Cout, 1)
    w_lin = jnp.transpose(params["lin_w"], (1, 0))                # (D, Hd)
    b_lin = params["lin_b"].reshape(1, Hd)

    x_lin = c_crossattn.reshape(Bs * S, D)

    vmem = pl.BlockSpec(memory_space=pltpu.MemorySpace.VMEM)
    conv_flat, lin_flat = pl.pallas_call(
        fused_hybrid_kernel,
        out_shape=(
            jax.ShapeDtypeStruct((B, Cout, H * W), c_concat.dtype),
            jax.ShapeDtypeStruct((Bs * S, Hd), c_crossattn.dtype),
        ),
        in_specs=[vmem] * 6,
        out_specs=(vmem, vmem),
    )(patches, w_conv_flat, b_conv, x_lin, w_lin, b_lin)

    c_concat_out = conv_flat.reshape(B, Cout, H, W)               # NCHW, contiguous reshape
    c_crossattn_out = lin_flat.reshape(Bs, S, Hd)
    # NOTE: the original module returns a dict of single-element lists.
    return {"c_concat": [c_concat_out], "c_crossattn": [c_crossattn_out]}


if __name__ == "__main__":
    key = jax.random.PRNGKey(0)
    k1, k2, k3, k4, k5, k6 = jax.random.split(key, 6)

    B, Cin, Hs, Ws = 2, 4, 16, 16        # concat branch (NCHW, PyTorch convention)
    Cout = 4
    S, D, Hd = 8, 32, 32                 # crossattn branch (B, S, D)

    # Deterministic synthetic parameters in *PyTorch* layouts.
    params = {
        "conv_w": (0.05 * jax.random.normal(k1, (Cout, Cin, 3, 3))).astype(jnp.float32),
        "conv_b": (0.01 * jax.random.normal(k2, (Cout,))).astype(jnp.float32),
        "lin_w": (0.05 * jax.random.normal(k3, (Hd, D))).astype(jnp.float32),
        "lin_b": (0.01 * jax.random.normal(k4, (Hd,))).astype(jnp.float32),
    }

    c_concat = jax.random.normal(k5, (B, Cin, Hs, Ws), dtype=jnp.float32)
    c_crossattn = jax.random.normal(k6, (B, S, D), dtype=jnp.float32)

    forward = jax.jit(hybrid_conditioner_forward)
    out = forward(c_concat, c_crossattn, params)
    out = jax.tree_util.tree_map(jax.block_until_ready, out)

    # Pure-JAX reference check from the PyTorch-layout weights.
    ref_conv = jax.lax.conv_general_dilated(
        c_concat, params["conv_w"], window_strides=(1, 1), padding="SAME",
        dimension_numbers=("NCHW", "OIHW", "NCHW"),
    ) + params["conv_b"].reshape(1, Cout, 1, 1)
    ref_lin = jnp.einsum("bsd,hd->bsh", c_crossattn, params["lin_w"]) + params["lin_b"]

    assert jnp.allclose(out["c_concat"][0], ref_conv, atol=1e-4, rtol=1e-4)
    assert jnp.allclose(out["c_crossattn"][0], ref_lin, atol=1e-4, rtol=1e-4)

    print("KERNEL_OK")
</pallas_src>

<mosaic_0001>
module attributes {stable_mosaic.version = 11 : i64} {
  func.func @fused_hybrid_kernel(%arg0: memref<2x36x256xf32, #tpu.memory_space<vmem>>, %arg1: memref<4x36xf32, #tpu.memory_space<vmem>>, %arg2: memref<4x1xf32, #tpu.memory_space<vmem>>, %arg3: memref<16x32xf32, #tpu.memory_space<vmem>>, %arg4: memref<32x32xf32, #tpu.memory_space<vmem>>, %arg5: memref<1x32xf32, #tpu.memory_space<vmem>>, %arg6: memref<2x4x256xf32, #tpu.memory_space<vmem>>, %arg7: memref<16x32xf32, #tpu.memory_space<vmem>>) attributes {dimension_semantics = [], scalar_prefetch = 0 : i64, scratch_operands = 0 : i64, tpu.core_type = #tpu.core_type<tc>} {
    %c0 = arith.constant 0 : index
    %c0_0 = arith.constant 0 : index
    %0 = vector.load %arg1[%c0, %c0_0] : memref<4x36xf32, #tpu.memory_space<vmem>>, vector<4x36xf32>
    %c0_1 = arith.constant 0 : index
    %c0_2 = arith.constant 0 : index
    %1 = vector.load %arg2[%c0_1, %c0_2] : memref<4x1xf32, #tpu.memory_space<vmem>>, vector<4x1xf32>
    %c0_3 = arith.constant 0 : index
    %c0_4 = arith.constant 0 : index
    %c0_5 = arith.constant 0 : index
    %2 = vector.load %arg0[%c0_3, %c0_4, %c0_5] : memref<2x36x256xf32, #tpu.memory_space<vmem>>, vector<1x36x256xf32>
    %3 = vector.shape_cast %2 : vector<1x36x256xf32> to vector<36x256xf32>
    %cst = arith.constant dense<0.000000e+00> : vector<4x256xf32>
    %4 = tpu.matmul %0, %3, %cst {dimension_numbers = #tpu.dot_dimension_numbers<[1], [0], [0], [1], [0, 0, 1, 1], [], []>} : vector<4x36xf32>, vector<36x256xf32>, vector<4x256xf32> -> vector<4x256xf32>
    %5 = vector.broadcast %1 : vector<4x1xf32> to vector<4x256xf32>
    %6 = arith.addf %4, %5 : vector<4x256xf32>
    %c0_6 = arith.constant 0 : index
    %c0_7 = arith.constant 0 : index
    %c0_8 = arith.constant 0 : index
    %7 = vector.load %arg6[%c0_6, %c0_7, %c0_8] : memref<2x4x256xf32, #tpu.memory_space<vmem>>, vector<1x4x256xf32>
    %8 = vector.shape_cast %7 : vector<1x4x256xf32> to vector<4x256xf32>
    %9 = vector.shape_cast %6 : vector<4x256xf32> to vector<1x4x256xf32>
    tpu.vector_store %arg6[%c0_6, %c0_7, %c0_8], %9 {strides = array<i32>} : memref<2x4x256xf32, #tpu.memory_space<vmem>>, vector<1x4x256xf32>,
    %c1 = arith.constant 1 : index
    %c0_9 = arith.constant 0 : index
    %c0_10 = arith.constant 0 : index
    %10 = vector.load %arg0[%c1, %c0_9, %c0_10] : memref<2x36x256xf32, #tpu.memory_space<vmem>>, vector<1x36x256xf32>
    %11 = vector.shape_cast %10 : vector<1x36x256xf32> to vector<36x256xf32>
    %cst_11 = arith.constant dense<0.000000e+00> : vector<4x256xf32>
    %12 = tpu.matmul %0, %11, %cst_11 {dimension_numbers = #tpu.dot_dimension_numbers<[1], [0], [0], [1], [0, 0, 1, 1], [], []>} : vector<4x36xf32>, vector<36x256xf32>, vector<4x256xf32> -> vector<4x256xf32>
    %13 = vector.broadcast %1 : vector<4x1xf32> to vector<4x256xf32>
    %14 = arith.addf %12, %13 : vector<4x256xf32>
    %c1_12 = arith.constant 1 : index
    %c0_13 = arith.constant 0 : index
    %c0_14 = arith.constant 0 : index
    %15 = vector.load %arg6[%c1_12, %c0_13, %c0_14] : memref<2x4x256xf32, #tpu.memory_space<vmem>>, vector<1x4x256xf32>
    %16 = vector.shape_cast %15 : vector<1x4x256xf32> to vector<4x256xf32>
    %17 = vector.shape_cast %14 : vector<4x256xf32> to vector<1x4x256xf32>
    tpu.vector_store %arg6[%c1_12, %c0_13, %c0_14], %17 {strides = array<i32>} : memref<2x4x256xf32, #tpu.memory_space<vmem>>, vector<1x4x256xf32>,
    %c0_15 = arith.constant 0 : index
    %c0_16 = arith.constant 0 : index
    %18 = vector.load %arg3[%c0_15, %c0_16] : memref<16x32xf32, #tpu.memory_space<vmem>>, vector<16x32xf32>
    %c0_17 = arith.constant 0 : index
    %c0_18 = arith.constant 0 : index
    %19 = vector.load %arg4[%c0_17, %c0_18] : memref<32x32xf32, #tpu.memory_space<vmem>>, vector<32x32xf32>
    %cst_19 = arith.constant dense<0.000000e+00> : vector<16x32xf32>
    %20 = tpu.matmul %18, %19, %cst_19 {dimension_numbers = #tpu.dot_dimension_numbers<[1], [0], [0], [1], [0, 0, 1, 1], [], []>} : vector<16x32xf32>, vector<32x32xf32>, vector<16x32xf32> -> vector<16x32xf32>
    %c0_20 = arith.constant 0 : index
    %c0_21 = arith.constant 0 : index
    %21 = vector.load %arg5[%c0_20, %c0_21] : memref<1x32xf32, #tpu.memory_space<vmem>>, vector<1x32xf32>
    %22 = vector.shape_cast %21 : vector<1x32xf32> to vector<32xf32>
    %23 = vector.shape_cast %22 : vector<32xf32> to vector<1x32xf32>
    %24 = vector.broadcast %23 : vector<1x32xf32> to vector<16x32xf32>
    %25 = arith.addf %20, %24 : vector<16x32xf32>
    %c0_22 = arith.constant 0 : index
    %c0_23 = arith.constant 0 : index
    %26 = vector.load %arg7[%c0_22, %c0_23] : memref<16x32xf32, #tpu.memory_space<vmem>>, vector<16x32xf32>
    tpu.vector_store %arg7[%c0_22, %c0_23], %25 {strides = array<i32>} : memref<16x32xf32, #tpu.memory_space<vmem>>, vector<16x32xf32>,
    return
  }
}

</mosaic_0001>

<llo_original>
// kernel: hybrid_conditioner_forward.1
$region0: #{hybrid_conditioner_forward.1}
  #allocation0 [shape = 'u32[]', space=smem, size = 0x4, offset = 0x4, fixed_abs, tag = 'smem constant byte address 0x4 - core index']
  #allocation1 [shape = 'u32[144,128]{1,0:T(1,128)}', space=vmem, size = 0x12000, scoped, tag = 'internal scratch']
  %s0 = inlined_call_operand.vmem [shape: f32[2,36,256], index: 0, kind: input, shape index: {}]
  %s1 = inlined_call_operand.vmem [shape: f32[4,36], index: 1, kind: input, shape index: {}]
  %s2 = inlined_call_operand.vmem [shape: f32[4,1], index: 2, kind: input, shape index: {}]
  %s3 = inlined_call_operand.vmem [shape: f32[16,32], index: 3, kind: input, shape index: {}]
  %s4 = inlined_call_operand.vmem [shape: f32[32,32], index: 4, kind: input, shape index: {}]
  %s5 = inlined_call_operand.vmem [shape: f32[1,32], index: 5, kind: input, shape index: {}]
  %s6 = inlined_call_operand.vmem [shape: f32[2,4,256], index: 6, kind: output, shape index: {0}]
  %s7 = inlined_call_operand.hbm [shape: f32[16,32], index: 7, kind: output, shape index: {1}]
  %8 = xla_tuple %s6, %s7
  %s9 = sld [smem:[#allocation0]]
  $region42: #{hybrid_conditioner_forward.1} parent=0
    _
  %s11 = ssub.s32 1, %s9
  %s12 = scalar_select 0, %s11, %s9
  $region1: #{hybrid_conditioner_forward.1} parent=0
    #allocation2 [shape = 'u8[8192]{0}', space=vmem, size = 0x2000, scoped, tag = 'output window, operand 1, single buffered']
    #allocation3 [shape = 's32[1]{0}', space=sflag, size = 0x4, scoped, tag = 'scoped memory for hybrid_conditioner_forward.1']
    %13 = vsyncpa [#allocation3], 0
    // Predicated region
    $region2: #{hybrid_conditioner_forward.1} parent=1 // pred_check
      _
    $region3: #{hybrid_conditioner_forward.1} parent=1 // pred_check_branch
      %15 = sbr.rel (0) target = $region5
    $region4: #{hybrid_conditioner_forward.1} parent=1 // pred_region
      _
    $region5: #{hybrid_conditioner_forward.1} parent=1 // pred_fallthru
      _
    // Predicated region
    $region6: #{hybrid_conditioner_forward.1} parent=1 // pred_check
      _
    $region7: #{hybrid_conditioner_forward.1} parent=1 // pred_check_branch
      %17 = sbr.rel (0) target = $region9
    $region8: #{hybrid_conditioner_forward.1} parent=1 // pred_region
      _
    $region9: #{hybrid_conditioner_forward.1} parent=1 // pred_fallthru
      _
    // Predicated region
    $region10: #{hybrid_conditioner_forward.1} parent=1 // pred_check
      _
    $region11: #{hybrid_conditioner_forward.1} parent=1 // pred_check_branch
      %19 = sbr.rel (0) target = $region13
    $region12: #{hybrid_conditioner_forward.1} parent=1 // pred_region
      _
    $region13: #{hybrid_conditioner_forward.1} parent=1 // pred_fallthru
      _
    // Predicated region
    $region14: #{hybrid_conditioner_forward.1} parent=1 // pred_check
      _
    $region15: #{hybrid_conditioner_forward.1} parent=1 // pred_check_branch
      %21 = sbr.rel (0) target = $region17
    $region16: #{hybrid_conditioner_forward.1} parent=1 // pred_region
      _
    $region17: #{hybrid_conditioner_forward.1} parent=1 // pred_fallthru
      _
    // Predicated region
    $region18: #{hybrid_conditioner_forward.1} parent=1 // pred_check
      _
    $region19: #{hybrid_conditioner_forward.1} parent=1 // pred_check_branch
      %23 = sbr.rel (0) target = $region21
    $region20: #{hybrid_conditioner_forward.1} parent=1 // pred_region
      _
    $region21: #{hybrid_conditioner_forward.1} parent=1 // pred_fallthru
      _
    // Predicated region
    $region22: #{hybrid_conditioner_forward.1} parent=1 // pred_check
      _
    $region23: #{hybrid_conditioner_forward.1} parent=1 // pred_check_branch
      %25 = sbr.rel (0) target = $region25
    $region24: #{hybrid_conditioner_forward.1} parent=1 // pred_region
      _
    $region25: #{hybrid_conditioner_forward.1} parent=1 // pred_fallthru
      _
    %v26 = vld [vmem:[%s1] sm:$0xf]
    %v27 = vld [vmem:[%s2] sm:$0xf]
    %v28 = vld [vmem:[%s0] sm:$0xff]
    %v29 = vld [vmem:[%s0 + $0x8] sm:$0xff]
    %v30 = vld [vmem:[%s0 + $0x10] sm:$0xff]
    %v31 = vld [vmem:[%s0 + $0x18] sm:$0xff]
    %v32 = vld [vmem:[%s0 + $0x20] sm:$0xff]
    %v33 = vld [vmem:[%s0 + $0x28] sm:$0xff]
    %v34 = vld [vmem:[%s0 + $0x30] sm:$0xff]
    %v35 = vld [vmem:[%s0 + $0x38] sm:$0xff]
    %v36 = vld [vmem:[%s0 + $0x40] sm:$0xf]
    %v37 = vld [vmem:[%s0 + $0x48] sm:$0xf]
    %39 = vset.pattern.permute.xlu0 0
    %40 = vperm.xlu0 %39, %v27
    %v41 = vpop.permute.xlu0 %40
    %vm43 = vcmask 293888
    %v45 = vsel %vm43, %v26, 0
    %vm47 = vcmask 1043456
    %v49 = vsel %vm47, %v36, 0
    %v52 = vsel %vm47, %v37, 0
    %54 = vmatprep.subr.mxu0 %v29
    %55 = vmatpush1.msra.mxu0 %v28
    %56 = vmatprep.subr.mxu0 %v31
    %57 = vmatpush1.msra.mxu0 %v30
    %58 = vmatprep.subr.mxu0 %v33
    %59 = vmatpush1.msra.mxu0 %v32
    %60 = vmatprep.subr.mxu0 %v35
    %61 = vmatpush1.msra.mxu0 %v34
    %62 = vmatprep.subr.mxu0 %v52
    %63 = vmatpush1.msra.mxu0 %v49
    %64 = vmatprep.subr.mxu0 0.0
    %65 = vmatpush1.msra.mxu0 0.0
    %66 = vmatprep.subr.mxu0 0.0
    %67 = vmatpush1.msra.mxu0 0.0
    %68 = vmatprep.subr.mxu0 0.0
    %69 = vmatpush1.msra.mxu0 0.0
    %70 = vmatprep.subr.mxu0 0.0
    %71 = vmatpush1.msra.mxu0 0.0
    %72 = vmatprep.subr.mxu0 0.0
    %73 = vmatpush1.msra.mxu0 0.0
    %74 = vmatprep.subr.mxu0 0.0
    %75 = vmatpush1.msra.mxu0 0.0
    %76 = vmatprep.subr.mxu0 0.0
    %77 = vmatpush1.msra.mxu0 0.0
    %78 = vmatprep.subr.mxu0 0.0
    %79 = vmatpush1.msra.mxu0 0.0
    %80 = vmatprep.subr.mxu0 0.0
    %81 = vmatpush1.msra.mxu0 0.0
    %82 = vmatprep.subr.mxu0 0.0
    %83 = vmatpush1.msra.mxu0 0.0
    %84 = vmatprep.subr.mxu0 0.0
    %85 = vmatpush1.msra.mxu0 0.0
    %86 = vmatprep.subr.mxu0 0.0
    %87 = vmatpush1.msra.mxu0 0.0
    %88 = vmatprep.subr.mxu0 0.0
    %89 = vmatpush1.msra.mxu0 0.0
    %90 = vmatprep.subr.mxu0 0.0
    %91 = vmatpush1.msra.mxu0 0.0
    %92 = vmatprep.subr.mxu0 0.0
    %93 = vmatpush1.msra.mxu0 0.0
    %94 = vmatprep.subr.mxu0 0.0
    %95 = vmatpush1.msra.mxu0 0.0
    %96 = vmatprep.subr.mxu0 0.0
    %97 = vmatpush1.msra.mxu0 0.0
    %98 = vmatprep.subr.mxu0 0.0
    %99 = vmatpush1.msra.mxu0 0.0
    %100 = vmatprep.subr.mxu0 0.0
    %101 = vmatpush1.msra.mxu0 0.0
    %102 = vmatprep.subr.mxu0 0.0
    %103 = vmatpush1.msra.mxu0 0.0
    %104 = vmatprep.subr.mxu0 0.0
    %105 = vmatpush1.msra.mxu0 0.0
    %106 = vmatprep.subr.mxu0 0.0
    %107 = vmatpush1.msra.mxu0 0.0
    %108 = vmatprep.subr.mxu0 0.0
    %109 = vmatpush1.msra.mxu0 0.0
    %110 = vmatprep.subr.mxu0 0.0
    %111 = vmatpush1.msra.mxu0 0.0
    %112 = vmatprep.subr.mxu0 0.0
    %113 = vmatpush1.msra.mxu0 0.0
    %114 = vmatprep.subr.mxu0 0.0
    %115 = vmatpush1.msra.mxu0 0.0
    %116 = vmatprep.subr.mxu0 0.0
    %117 = vmatpush1.msra.mxu0 0.0
    %118 = vmatprep.mubr.f32.mxu0 0.0
    %119 = vmatmul.mubr.f32.gmra.mrb[0].mxu0 %v45
    %v120 = vpop.f32.mrb[0].mxu0
    %v121 = vadd.f32 %v41, %v120
    %v122 = vpop.f32.mrb[0].mxu0
    %v123 = vadd.f32 %v41, %v122
    %124 = vdwg.mxu0
    %v127 = vcombine.low %v121, %v123
    %129 = vst [vmem:[%s6] sm:$0xff] %v127
    %s130 = scalar_lea.vmem %s0, 80
    %v131 = vld [vmem:[%s130] sm:$0xff]
    %v132 = vld [vmem:[%s130 + $0x8] sm:$0xff]
    %v133 = vld [vmem:[%s130 + $0x10] sm:$0xff]
    %v134 = vld [vmem:[%s130 + $0x18] sm:$0xff]
    %v135 = vld [vmem:[%s130 + $0x20] sm:$0xff]
    %v136 = vld [vmem:[%s130 + $0x28] sm:$0xff]
    %v137 = vld [vmem:[%s130 + $0x30] sm:$0xff]
    %v138 = vld [vmem:[%s130 + $0x38] sm:$0xff]
    %v139 = vld [vmem:[%s130 + $0x40] sm:$0xf]
    %v140 = vld [vmem:[%s130 + $0x48] sm:$0xf]
    %v142 = vsel %vm47, %v139, 0
    %v145 = vsel %vm47, %v140, 0
    %147 = vmatprep.subr.mxu0 %v132
    %148 = vmatpush1.msra.mxu0 %v131
    %149 = vmatprep.subr.mxu0 %v134
    %150 = vmatpush1.msra.mxu0 %v133
    %151 = vmatprep.subr.mxu0 %v136
    %152 = vmatpush1.msra.mxu0 %v135
    %153 = vmatprep.subr.mxu0 %v138
    %154 = vmatpush1.msra.mxu0 %v137
    %155 = vmatprep.subr.mxu0 %v145
    %156 = vmatpush1.msra.mxu0 %v142
    %157 = vmatprep.subr.mxu0 0.0
    %158 = vmatpush1.msra.mxu0 0.0
    %159 = vmatprep.subr.mxu0 0.0
    %160 = vmatpush1.msra.mxu0 0.0
    %161 = vmatprep.subr.mxu0 0.0
    %162 = vmatpush1.msra.mxu0 0.0
    %163 = vmatprep.subr.mxu0 0.0
    %164 = vmatpush1.msra.mxu0 0.0
    %165 = vmatprep.subr.mxu0 0.0
    %166 = vmatpush1.msra.mxu0 0.0
    %167 = vmatprep.subr.mxu0 0.0
    %168 = vmatpush1.msra.mxu0 0.0
    %169 = vmatprep.subr.mxu0 0.0
    %170 = vmatpush1.msra.mxu0 0.0
    %171 = vmatprep.subr.mxu0 0.0
    %172 = vmatpush1.msra.mxu0 0.0
    %173 = vmatprep.subr.mxu0 0.0
    %174 = vmatpush1.msra.mxu0 0.0
    %175 = vmatprep.subr.mxu0 0.0
    %176 = vmatpush1.msra.mxu0 0.0
    %177 = vmatprep.subr.mxu0 0.0
    %178 = vmatpush1.msra.mxu0 0.0
    %179 = vmatprep.subr.mxu0 0.0
    %180 = vmatpush1.msra.mxu0 0.0
    %181 = vmatprep.subr.mxu0 0.0
    %182 = vmatpush1.msra.mxu0 0.0
    %183 = vmatprep.subr.mxu0 0.0
    %184 = vmatpush1.msra.mxu0 0.0
    %185 = vmatprep.subr.mxu0 0.0
    %186 = vmatpush1.msra.mxu0 0.0
    %187 = vmatprep.subr.mxu0 0.0
    %188 = vmatpush1.msra.mxu0 0.0
    %189 = vmatprep.subr.mxu0 0.0
    %190 = vmatpush1.msra.mxu0 0.0
    %191 = vmatprep.subr.mxu0 0.0
    %192 = vmatpush1.msra.mxu0 0.0
    %193 = vmatprep.subr.mxu0 0.0
    %194 = vmatpush1.msra.mxu0 0.0
    %195 = vmatprep.subr.mxu0 0.0
    %196 = vmatpush1.msra.mxu0 0.0
    %197 = vmatprep.subr.mxu0 0.0
    %198 = vmatpush1.msra.mxu0 0.0
    %199 = vmatprep.subr.mxu0 0.0
    %200 = vmatpush1.msra.mxu0 0.0
    %201 = vmatprep.subr.mxu0 0.0
    %202 = vmatpush1.msra.mxu0 0.0
    %203 = vmatprep.subr.mxu0 0.0
    %204 = vmatpush1.msra.mxu0 0.0
    %205 = vmatprep.subr.mxu0 0.0
    %206 = vmatpush1.msra.mxu0 0.0
    %207 = vmatprep.subr.mxu0 0.0
    %208 = vmatpush1.msra.mxu0 0.0
    %209 = vmatprep.subr.mxu0 0.0
    %210 = vmatpush1.msra.mxu0 0.0
    %211 = vmatprep.mubr.f32.mxu0 0.0
    %212 = vmatmul.mubr.f32.gmra.mrb[0].mxu0 %v45
    %v213 = vpop.f32.mrb[0].mxu0
    %v214 = vadd.f32 %v41, %v213
    %v215 = vpop.f32.mrb[0].mxu0
    %v216 = vadd.f32 %v41, %v215
    %217 = vdwg.mxu0
    %v220 = vcombine.low %v214, %v216
    %s222 = scalar_lea.vmem %s6, 8
    %223 = vst [vmem:[%s222] sm:$0xff] %v220
    %v224 = vld [vmem:[%s3] sm:$0xff]
    %v225 = vld [vmem:[%s3 + $0x8] sm:$0xff]
    %v226 = vld [vmem:[%s4] sm:$0xff]
    %v227 = vld [vmem:[%s4 + $0x8] sm:$0xff]
    %v228 = vld [vmem:[%s4 + $0x10] sm:$0xff]
    %v229 = vld [vmem:[%s4 + $0x18] sm:$0xff]
    %v230 = vld [vmem:[%s5] sm:$0x1]
    %v232 = vlaneseq
    %v233 = vshrl.u32 %v232, 7
    %v234 = vsub.s32 0, %v233
    %v235 = vrot.slane %v230, %v234
    %vm237 = vcmask 261120
    %v239 = vsel %vm237, %v224, 0
    %v242 = vsel %vm237, %v225, 0
    %244 = vmatprep.subr.mxu0 0.0
    %245 = vmatpush1.msra.mxu0 %v226
    %246 = vmatprep.subr.mxu0 0.0
    %247 = vmatpush1.msra.mxu0 %v227
    %248 = vmatprep.subr.mxu0 0.0
    %249 = vmatpush1.msra.mxu0 %v228
    %250 = vmatprep.subr.mxu0 0.0
    %251 = vmatpush1.msra.mxu0 %v229
    %252 = vmatprep.subr.mxu0 0.0
    %253 = vmatpush1.msra.mxu0 0.0
    %254 = vmatprep.subr.mxu0 0.0
    %255 = vmatpush1.msra.mxu0 0.0
    %256 = vmatprep.subr.mxu0 0.0
    %257 = vmatpush1.msra.mxu0 0.0
    %258 = vmatprep.subr.mxu0 0.0
    %259 = vmatpush1.msra.mxu0 0.0
    %260 = vmatprep.subr.mxu0 0.0
    %261 = vmatpush1.msra.mxu0 0.0
    %262 = vmatprep.subr.mxu0 0.0
    %263 = vmatpush1.msra.mxu0 0.0
    %264 = vmatprep.subr.mxu0 0.0
    %265 = vmatpush1.msra.mxu0 0.0
    %266 = vmatprep.subr.mxu0 0.0
    %267 = vmatpush1.msra.mxu0 0.0
    %268 = vmatprep.subr.mxu0 0.0
    %269 = vmatpush1.msra.mxu0 0.0
    %270 = vmatprep.subr.mxu0 0.0
    %271 = vmatpush1.msra.mxu0 0.0
    %272 = vmatprep.subr.mxu0 0.0
    %273 = vmatpush1.msra.mxu0 0.0
    %274 = vmatprep.subr.mxu0 0.0
    %275 = vmatpush1.msra.mxu0 0.0
    %276 = vmatprep.subr.mxu0 0.0
    %277 = vmatpush1.msra.mxu0 0.0
    %278 = vmatprep.subr.mxu0 0.0
    %279 = vmatpush1.msra.mxu0 0.0
    %280 = vmatprep.subr.mxu0 0.0
    %281 = vmatpush1.msra.mxu0 0.0
    %282 = vmatprep.subr.mxu0 0.0
    %283 = vmatpush1.msra.mxu0 0.0
    %284 = vmatprep.subr.mxu0 0.0
    %285 = vmatpush1.msra.mxu0 0.0
    %286 = vmatprep.subr.mxu0 0.0
    %287 = vmatpush1.msra.mxu0 0.0
    %288 = vmatprep.subr.mxu0 0.0
    %289 = vmatpush1.msra.mxu0 0.0
    %290 = vmatprep.subr.mxu0 0.0
    %291 = vmatpush1.msra.mxu0 0.0
    %292 = vmatprep.subr.mxu0 0.0
    %293 = vmatpush1.msra.mxu0 0.0
    %294 = vmatprep.subr.mxu0 0.0
    %295 = vmatpush1.msra.mxu0 0.0
    %296 = vmatprep.subr.mxu0 0.0
    %297 = vmatpush1.msra.mxu0 0.0
    %298 = vmatprep.subr.mxu0 0.0
    %299 = vmatpush1.msra.mxu0 0.0
    %300 = vmatprep.subr.mxu0 0.0
    %301 = vmatpush1.msra.mxu0 0.0
    %302 = vmatprep.subr.mxu0 0.0
    %303 = vmatpush1.msra.mxu0 0.0
    %304 = vmatprep.subr.mxu0 0.0
    %305 = vmatpush1.msra.mxu0 0.0
    %306 = vmatprep.subr.mxu0 0.0
    %307 = vmatpush1.msra.mxu0 0.0
    %308 = vmatprep.mubr.f32.mxu0 0.0
    %309 = vmatmul.mubr.f32.gmra.mrb[0].mxu0 %v239
    %v310 = vpop.f32.mrb[0].mxu0
    %v311 = vadd.f32 %v235, %v310
    %v312 = vpop.f32.mrb[0].mxu0
    %313 = vmatprep.mubr.f32.mxu0 0.0
    %314 = vmatmul.mubr.f32.gmra.mrb[0].mxu0 %v242
    %v315 = vpop.f32.mrb[0].mxu0
    %v316 = vadd.f32 %v235, %v315
    %v317 = vpop.f32.mrb[0].mxu0
    %318 = vdwg.mxu0
    %319 = vst.msk [vmem:[#allocation2] sm:$0xff] %vm237, %v311
    %320 = vst.msk [vmem:[#allocation2 + $0x8] sm:$0xff] %vm237, %v316
    // Predicated region
    $region26: #{hybrid_conditioner_forward.1} parent=1 // pred_check
      _
    $region27: #{hybrid_conditioner_forward.1} parent=1 // pred_check_branch
      %322 = sbr.rel (0) target = $region29
    $region28: #{hybrid_conditioner_forward.1} parent=1 // pred_region
      _
    $region29: #{hybrid_conditioner_forward.1} parent=1 // pred_fallthru
      _
    // Predicated region
    $region30: #{hybrid_conditioner_forward.1} parent=1 // pred_check
      _
    $region31: #{hybrid_conditioner_forward.1} parent=1 // pred_check_branch
      %324 = sbr.rel (0) target = $region33
    $region32: #{hybrid_conditioner_forward.1} parent=1 // pred_region
      %s326 = ssub.s32 256, 256
      %327 = vsyncadd [#allocation3], %s326
      %s328 = sshll.u32 [#allocation2], 4
      %s329 = int_to_ptr.vmem [resolvable:$true] %s328
      %334 = dma.vmem_to_hbm [thread:$0]  %s329, 256, %s7, [#allocation3], 128, 128, 8
    $region33: #{hybrid_conditioner_forward.1} parent=1 // pred_fallthru
      _
    // Predicated region
    $region34: #{hybrid_conditioner_forward.1} parent=1 // pred_check
      _
    $region35: #{hybrid_conditioner_forward.1} parent=1 // pred_check_branch
      %336 = sbr.rel (0) target = $region37
    $region36: #{hybrid_conditioner_forward.1} parent=1 // pred_region
      _
    $region37: #{hybrid_conditioner_forward.1} parent=1 // pred_fallthru
      _
    // Predicated region
    $region38: #{hybrid_conditioner_forward.1} parent=1 // pred_check
      _
    $region39: #{hybrid_conditioner_forward.1} parent=1 // pred_check_branch
      %338 = sbr.rel (0) target = $region41
    $region40: #{hybrid_conditioner_forward.1} parent=1 // pred_region
      %339 = dma.done [#allocation3], 256
    $region41: #{hybrid_conditioner_forward.1} parent=1 // pred_fallthru
      _
    %340 = vsyncpa [#allocation3], 1

</llo_original>
